<compile_context>
chip_gen: v6e
topology: v6e:2x2x1
jax: 0.10.0
libtpu: 0.0.40
codegen_flags: <defaults>
</compile_context>

<pallas_src>
import functools

import jax
import jax.numpy as jnp
from jax.experimental import pallas as pl
from jax.experimental.pallas import tpu as pltpu


def _layer_norm(x, gamma, beta, eps=1e-5):
    mean = jnp.mean(x, axis=-1, keepdims=True)
    var = jnp.mean((x - mean) ** 2, axis=-1, keepdims=True)
    return (x - mean) * jax.lax.rsqrt(var + eps) * gamma + beta


def _const_spec(shape, single_buffer):
    """BlockSpec for a grid-invariant block (weights / packed params)."""
    index_map = lambda *_: (0,) * len(shape)
    if single_buffer and hasattr(pl, "Buffered"):
        try:
            # Grid-invariant -> a single VMEM buffer is enough.
            return pl.BlockSpec(shape, index_map, pipeline_mode=pl.Buffered(1))
        except TypeError:
            pass  # older BlockSpec without pipeline_mode -> default buffering
    return pl.BlockSpec(shape, index_map)


def _derive_vmem_limit():
    """3/4 of physical VMEM (~48 MiB v7x, ~96 MiB v5e/v6e); None off-TPU."""
    try:
        info = pltpu.get_tpu_info()
        cap = getattr(info, "vmem_capacity_bytes", None)
        if cap:
            return int(cap) * 3 // 4
    except Exception:
        pass
    return None


def _compiler_params(dimension_semantics):
    kwargs = dict(dimension_semantics=dimension_semantics)
    limit = _derive_vmem_limit()
    if limit is not None:
        kwargs["vmem_limit_bytes"] = limit
    return pltpu.CompilerParams(**kwargs)


# --------------------- Kernel 1: LayerNorm1 + K/V projection ------------------
def _kv_projection_kernel(x_ref, wk_t_ref, wv_ref, vec_ref, kt_ref, v_ref,
                          *, num_heads, head_size, compute_dtype):
    f32 = jnp.float32
    x = x_ref[0]                                               # (T, D) f32
    T = x.shape[0]
    h1 = _layer_norm(x, vec_ref[0:1, :], vec_ref[1:2, :])
    h1_c = h1.astype(compute_dtype)
    # K produced transposed: one (T,D)->(D,T) transpose per *batch*; the
    # per-head split of (D,T) is then a free leading-dim reshape.
    k_t = jnp.dot(wk_t_ref[...], h1_c.T, preferred_element_type=f32)   # (D, T)
    kt_ref[0] = k_t.reshape(num_heads, head_size, T).astype(compute_dtype)
    # V kept row-major; (T,H,hs) -> (H,T,hs) is a leading-dim permute only
    # (lane dim hs untouched).
    v = jnp.dot(h1_c, wv_ref[...], preferred_element_type=f32)          # (T, D)
    v_ref[0] = jnp.swapaxes(
        v.reshape(T, num_heads, head_size), 0, 1).astype(compute_dtype)


# ------------- Kernel 2: flash attention + projection + LN2 + FFN -------------
def _attention_ffn_kernel(x_ref, kt_ref, v_ref,
                          wq_t_ref, wp_ref, w1_ref, w2_ref, vec_ref, b1_ref,
                          out_ref,
                          q_sc, m_sc, l_sc, acc_sc,
                          *, num_heads, head_size, q_block, kv_block,
                          compute_dtype):
    f32 = jnp.float32
    cdt = compute_dtype
    H, hs, TQ, TK = num_heads, head_size, q_block, kv_block
    D = H * hs

    qi = pl.program_id(1)
    kv = pl.program_id(2)
    n_kv = pl.num_programs(2)

    # ---- per-(batch, q-tile) init: Q projection + online-softmax state ------
    @pl.when(kv == 0)
    def _init():
        x_q = x_ref[0]                                        # (TQ, D) f32
        h1_q = _layer_norm(x_q, vec_ref[0:1, :], vec_ref[1:2, :])
        # Cast before the transpose (halves relayout bytes); the per-head split
        # of the transposed projection is then a free leading-dim reshape.
        q_t = jnp.dot(wq_t_ref[...], h1_q.astype(cdt).T,
                      preferred_element_type=f32)             # (D, TQ)
        # NOTE: the reference scales scores by dim_embed**-0.5 (NOT hs**-0.5);
        # keep it — fold the scale into Q once.
        q_sc[...] = (q_t * (D ** -0.5)).astype(cdt).reshape(H, hs, TQ)
        m_sc[...] = jnp.full(m_sc.shape, -1e30, f32)   # finite -> no NaN risk
        l_sc[...] = jnp.zeros(l_sc.shape, f32)
        acc_sc[...] = jnp.zeros(acc_sc.shape, f32)

    # ---- online-softmax update, only for causally live KV tiles -------------
    q_end = qi * TQ + (TQ - 1)

    @pl.when(kv * TK <= q_end)
    def _attend():
        k_t = kt_ref[0]                                       # (H, hs, TK)
        v_b = v_ref[0]                                        # (H, TK, hs)
        s = jnp.einsum("hdq,hdk->hqk", q_sc[...], k_t,
                       preferred_element_type=f32)            # (H, TQ, TK)
        row = qi * TQ + jax.lax.broadcasted_iota(jnp.int32, (TQ, TK), 0)
        col = kv * TK + jax.lax.broadcasted_iota(jnp.int32, (TQ, TK), 1)
        s = jnp.where((col <= row)[None], s, -1e30)           # finite mask fill

        m_prev = m_sc[...]                                    # (H, TQ, 1)
        m_new = jnp.maximum(m_prev, jnp.max(s, axis=-1, keepdims=True))
        alpha = jnp.exp(m_prev - m_new)                       # (H, TQ, 1)
        p = jnp.exp(s - m_new)                                # (H, TQ, TK) f32
        l_sc[...] = alpha * l_sc[...] + jnp.sum(p, axis=-1, keepdims=True)
        acc_sc[...] = alpha * acc_sc[...] + jnp.einsum(
            "hqk,hkd->hqd", p.astype(cdt), v_b, preferred_element_type=f32)
        m_sc[...] = m_new

    # ---- finalize on the last KV step: proj + residual + LN2 + FFN ----------
    @pl.when(kv == n_kv - 1)
    def _finalize():
        x_q = x_ref[0]                                        # (TQ, D) f32
        o = acc_sc[...] / l_sc[...]                           # (H, TQ, hs) f32
        # (H,TQ,hs) -> (TQ,H,hs): leading-dim permute (lane dim untouched).
        o2 = jnp.swapaxes(o, 0, 1).reshape(TQ, D).astype(cdt)
        attn = jnp.dot(o2, wp_ref[...], preferred_element_type=f32)   # (TQ, D)
        res1 = x_q + attn + vec_ref[4:5, :]                   # residual 1 (f32)

        h2 = _layer_norm(res1, vec_ref[2:3, :], vec_ref[3:4, :]).astype(cdt)
        hid = jnp.dot(h2, w1_ref[...], preferred_element_type=f32) + b1_ref[...]
        hid = jnp.maximum(hid, 0.0).astype(cdt)               # (TQ, 4D)
        ffn = jnp.dot(hid, w2_ref[...], preferred_element_type=f32) + vec_ref[5:6, :]
        out_ref[0] = (res1 + ffn).astype(out_ref.dtype)       # residual 2


# -------------------------------- wrapper -------------------------------------
def transformer_block(x, params, num_heads, *, q_block=None, kv_block=None,
                      compute_dtype=None):
    (ln1_g, ln1_b, wq, wk, wv, wp, bp, ln2_g, ln2_b, w1, b1, w2, b2) = params
    B, T, D = x.shape
    assert D % num_heads == 0
    head_size = D // num_heads
    H4 = 4 * D
    f32 = jnp.float32

    on_tpu = jax.default_backend() == "tpu"
    if compute_dtype is None:
        # bf16 matmul operands (f32 accumulation) only on a real TPU backend;
        # XLA-CPU / interpret hosts cannot execute bf16 x bf16 -> f32 dots.
        compute_dtype = jnp.bfloat16 if on_tpu else jnp.float32
    cdt = compute_dtype

    # Tile sizes.  TODO(synk): pick per generation — TQ=128 (+ head-group
    # looping) on v7x's 64 MiB VMEM; up to 512 on v5e/v6e.
    if q_block is None:
        q_block = 256 if T % 256 == 0 else T
    if kv_block is None:
        kv_block = 256 if T % 256 == 0 else T
    assert T % q_block == 0 and T % kv_block == 0
    n_q, n_kv = T // q_block, T // kv_block

    # Weights in compute dtype; Q/K pre-transposed so the per-head split in the
    # kernels is a free leading-dim reshape.
    wq_t = wq.T.astype(cdt)                      # (D, D)
    wk_t = wk.T.astype(cdt)                      # (D, D)
    wv_c = wv.astype(cdt)                        # (D, D)
    wp_c = wp.astype(cdt)                        # (D, D)
    w1_c = w1.astype(cdt)                        # (D, 4D)
    w2_c = w2.astype(cdt)                        # (4D, D)
    # Per-channel params packed into one lane-dense block:
    # rows = [ln1_g, ln1_b, ln2_g, ln2_b, proj_bias, ffn2_bias].
    vec_params = jnp.concatenate([ln1_g, ln1_b, ln2_g, ln2_b, bp, b2],
                                 axis=0).astype(f32)          # (6, D)
    b1_f = b1.astype(f32)                                     # (1, 4D)

    cspec = lambda shape: _const_spec(shape, single_buffer=on_tpu)

    # ---- Kernel 1: LayerNorm1 + K/V projection, once per batch row ----------
    kv_kernel = functools.partial(
        _kv_projection_kernel, num_heads=num_heads, head_size=head_size,
        compute_dtype=cdt)
    k_t, v_r = pl.pallas_call(
        kv_kernel,
        out_shape=(jax.ShapeDtypeStruct((B, num_heads, head_size, T), cdt),
                   jax.ShapeDtypeStruct((B, num_heads, T, head_size), cdt)),
        grid=(B,),
        in_specs=[
            pl.BlockSpec((1, T, D), lambda b: (b, 0, 0)),
            cspec((D, D)),            # Wk^T
            cspec((D, D)),            # Wv
            cspec((6, D)),            # packed per-channel params
        ],
        out_specs=(
            pl.BlockSpec((1, num_heads, head_size, T), lambda b: (b, 0, 0, 0)),
            pl.BlockSpec((1, num_heads, T, head_size), lambda b: (b, 0, 0, 0)),
        ),
        compiler_params=_compiler_params(("parallel",)),
    )(x, wk_t, wv_c, vec_params)

    # ---- Kernel 2: flash-style attention + projection + LN2 + FFN -----------
    main_kernel = functools.partial(
        _attention_ffn_kernel, num_heads=num_heads, head_size=head_size,
        q_block=q_block, kv_block=kv_block, compute_dtype=cdt)
    return pl.pallas_call(
        main_kernel,
        out_shape=jax.ShapeDtypeStruct((B, T, D), x.dtype),
        grid=(B, n_q, n_kv),
        in_specs=[
            pl.BlockSpec((1, q_block, D), lambda b, qi, kv: (b, qi, 0)),
            pl.BlockSpec((1, num_heads, head_size, kv_block),
                         lambda b, qi, kv: (b, 0, 0, kv)),
            pl.BlockSpec((1, num_heads, kv_block, head_size),
                         lambda b, qi, kv: (b, 0, kv, 0)),
            cspec((D, D)),            # Wq^T
            cspec((D, D)),            # Wp (output projection)
            cspec((D, H4)),           # FFN w1
            cspec((H4, D)),           # FFN w2
            cspec((6, D)),            # packed per-channel params
            cspec((1, H4)),           # FFN b1
        ],
        out_specs=pl.BlockSpec((1, q_block, D), lambda b, qi, kv: (b, qi, 0)),
        scratch_shapes=[
            pltpu.VMEM((num_heads, head_size, q_block), cdt),   # cached Q^T
            pltpu.VMEM((num_heads, q_block, 1), f32),           # running max
            pltpu.VMEM((num_heads, q_block, 1), f32),           # running sum
            pltpu.VMEM((num_heads, q_block, head_size), f32),   # output acc
        ],
        compiler_params=_compiler_params(("parallel", "parallel", "arbitrary")),
    )(x, k_t, v_r, wq_t, wp_c, w1_c, w2_c, vec_params, b1_f)


# -------------------- pure-JAX reference (for verification) -------------------
def reference_block(x, params, num_heads):
    (ln1_g, ln1_b, wq, wk, wv, wp, bp, ln2_g, ln2_b, w1, b1, w2, b2) = params
    B, T, D = x.shape
    hs = D // num_heads

    def ln(y, g, b):
        m = jnp.mean(y, axis=-1, keepdims=True)
        v = jnp.mean((y - m) ** 2, axis=-1, keepdims=True)
        return (y - m) / jnp.sqrt(v + 1e-5) * g[0] + b[0]

    h1 = ln(x, ln1_g, ln1_b)
    q = h1 @ wq
    k = h1 @ wk
    v = h1 @ wv
    mask = jnp.tril(jnp.ones((T, T), bool))
    outs = []
    for h in range(num_heads):
        sl = slice(h * hs, (h + 1) * hs)
        s = jnp.einsum("btd,bsd->bts", q[..., sl], k[..., sl]) * (D ** -0.5)
        s = jnp.where(mask, s, -jnp.inf)
        p = jax.nn.softmax(s, axis=-1)
        outs.append(jnp.einsum("bts,bsd->btd", p, v[..., sl]))
    attn = jnp.concatenate(outs, axis=-1) @ wp + bp[0]
    r1 = x + attn
    h2 = ln(r1, ln2_g, ln2_b)
    ffn = jnp.maximum(h2 @ w1 + b1[0], 0.0) @ w2 + b2[0]
    return r1 + ffn


if __name__ == "__main__":
    B, T, D = 2, 16, 32
    num_heads = 4

    key = jax.random.PRNGKey(0)
    keys = jax.random.split(key, 10)
    x = jax.random.normal(keys[0], (B, T, D), jnp.float32)

    scale = 0.05
    params = (
        jnp.ones((1, D), jnp.float32),                                # ln1 gamma
        jnp.zeros((1, D), jnp.float32),                               # ln1 beta
        scale * jax.random.normal(keys[1], (D, D), jnp.float32),      # wq
        scale * jax.random.normal(keys[2], (D, D), jnp.float32),      # wk
        scale * jax.random.normal(keys[3], (D, D), jnp.float32),      # wv
        scale * jax.random.normal(keys[4], (D, D), jnp.float32),      # proj W
        scale * jax.random.normal(keys[5], (1, D), jnp.float32),      # proj b
        jnp.ones((1, D), jnp.float32),                                # ln2 gamma
        jnp.zeros((1, D), jnp.float32),                               # ln2 beta
        scale * jax.random.normal(keys[6], (D, 4 * D), jnp.float32),  # ffn w1
        scale * jax.random.normal(keys[7], (1, 4 * D), jnp.float32),  # ffn b1
        scale * jax.random.normal(keys[8], (4 * D, D), jnp.float32),  # ffn w2
        scale * jax.random.normal(keys[9], (1, D), jnp.float32),      # ffn b2
    )

    # q_block=8 exercises multiple query tiles; kv_block=T keeps the lane-dim
    # tiling constraint (multiple of 128 or full extent) satisfied at tiny T.
    out = transformer_block(x, params, num_heads, q_block=8, kv_block=T)
    out = jax.block_until_ready(out)

    ref = reference_block(x, params, num_heads)
    assert out.shape == (B, T, D)
    err = float(jnp.max(jnp.abs(out - ref)))
    # bf16 matmul operands on TPU (f32 accumulate) vs f32 reference -> loose
    # tolerance; pure-f32 path (CPU/interpret) -> tight tolerance.
    tol = 5e-2 if jax.default_backend() == "tpu" else 5e-3
    assert err < tol, f"mismatch vs reference: max abs err = {err}"

    print("KERNEL_OK")
</pallas_src>

<mosaic_0001>
module attributes {stable_mosaic.version = 11 : i64} {
  func.func @_kv_projection_kernel(%arg0: i32, %arg1: memref<1x16x32xf32, #tpu.memory_space<vmem>>, %arg2: memref<32x32xf32, #tpu.memory_space<vmem>>, %arg3: memref<32x32xf32, #tpu.memory_space<vmem>>, %arg4: memref<6x32xf32, #tpu.memory_space<vmem>>, %arg5: memref<1x4x8x16xf32, #tpu.memory_space<vmem>>, %arg6: memref<1x4x16x8xf32, #tpu.memory_space<vmem>>) attributes {dimension_semantics = [#tpu.dimension_semantics<parallel>], iteration_bounds = array<i64: 2>, scalar_prefetch = 0 : i64, scratch_operands = 0 : i64, tpu.core_type = #tpu.core_type<tc>, window_params = [{transform_indices = @transform_0, window_bounds = array<i64: 1, 16, 32>}, {pipeline_mode = #tpu.pipeline_mode<synchronous>, transform_indices = @transform_1, window_bounds = array<i64: 32, 32>}, {pipeline_mode = #tpu.pipeline_mode<synchronous>, transform_indices = @transform_2, window_bounds = array<i64: 32, 32>}, {pipeline_mode = #tpu.pipeline_mode<synchronous>, transform_indices = @transform_3, window_bounds = array<i64: 6, 32>}, {transform_indices = @transform_4, window_bounds = array<i64: 1, 4, 8, 16>}, {transform_indices = @transform_5, window_bounds = array<i64: 1, 4, 16, 8>}]} {
    %c0 = arith.constant 0 : index
    %c0_0 = arith.constant 0 : index
    %c0_1 = arith.constant 0 : index
    %0 = vector.load %arg1[%c0, %c0_0, %c0_1] : memref<1x16x32xf32, #tpu.memory_space<vmem>>, vector<1x16x32xf32>
    %1 = vector.shape_cast %0 : vector<1x16x32xf32> to vector<16x32xf32>
    %c0_2 = arith.constant 0 : index
    %c0_3 = arith.constant 0 : index
    %2 = vector.load %arg4[%c0_2, %c0_3] : memref<6x32xf32, #tpu.memory_space<vmem>>, vector<1x32xf32>
    %c1 = arith.constant 1 : index
    %c0_4 = arith.constant 0 : index
    %3 = vector.load %arg4[%c1, %c0_4] : memref<6x32xf32, #tpu.memory_space<vmem>>, vector<1x32xf32>
    %cst = arith.constant dense<0.000000e+00> : vector<16xf32>
    %4 = vector.multi_reduction <add>, %1, %cst [1] : vector<16x32xf32> to vector<16xf32>
    %5 = vector.shape_cast %4 : vector<16xf32> to vector<16x1xf32>
    %cst_5 = arith.constant 3.200000e+01 : f32
    %6 = vector.broadcast %cst_5 : f32 to vector<16x1xf32>
    %7 = arith.divf %5, %6 : vector<16x1xf32>
    %8 = vector.broadcast %7 : vector<16x1xf32> to vector<16x32xf32>
    %9 = arith.subf %1, %8 : vector<16x32xf32>
    %10 = arith.mulf %9, %9 : vector<16x32xf32>
    %cst_6 = arith.constant dense<0.000000e+00> : vector<16xf32>
    %11 = vector.multi_reduction <add>, %10, %cst_6 [1] : vector<16x32xf32> to vector<16xf32>
    %12 = vector.shape_cast %11 : vector<16xf32> to vector<16x1xf32>
    %cst_7 = arith.constant 3.200000e+01 : f32
    %13 = vector.broadcast %cst_7 : f32 to vector<16x1xf32>
    %14 = arith.divf %12, %13 : vector<16x1xf32>
    %15 = vector.broadcast %7 : vector<16x1xf32> to vector<16x32xf32>
    %16 = arith.subf %1, %15 : vector<16x32xf32>
    %cst_8 = arith.constant 9.99999974E-6 : f32
    %17 = vector.broadcast %cst_8 : f32 to vector<16x1xf32>
    %18 = arith.addf %14, %17 : vector<16x1xf32>
    %19 = math.rsqrt %18 : vector<16x1xf32>
    %20 = vector.broadcast %19 : vector<16x1xf32> to vector<16x32xf32>
    %21 = arith.mulf %16, %20 : vector<16x32xf32>
    %22 = vector.broadcast %2 : vector<1x32xf32> to vector<16x32xf32>
    %23 = arith.mulf %21, %22 : vector<16x32xf32>
    %24 = vector.broadcast %3 : vector<1x32xf32> to vector<16x32xf32>
    %25 = arith.addf %23, %24 : vector<16x32xf32>
    %c0_9 = arith.constant 0 : index
    %c0_10 = arith.constant 0 : index
    %26 = vector.load %arg2[%c0_9, %c0_10] : memref<32x32xf32, #tpu.memory_space<vmem>>, vector<32x32xf32>
    %27 = tpu.transpose %25, [1, 0] : vector<16x32xf32> -> vector<32x16xf32>
    %cst_11 = arith.constant dense<0.000000e+00> : vector<32x16xf32>
    %28 = tpu.matmul %26, %27, %cst_11 {dimension_numbers = #tpu.dot_dimension_numbers<[1], [0], [0], [1], [0, 0, 1, 1], [], []>} : vector<32x32xf32>, vector<32x16xf32>, vector<32x16xf32> -> vector<32x16xf32>
    %29 = vector.shape_cast %28 : vector<32x16xf32> to vector<4x8x16xf32>
    %c0_12 = arith.constant 0 : index
    %c0_13 = arith.constant 0 : index
    %c0_14 = arith.constant 0 : index
    %c0_15 = arith.constant 0 : index
    %30 = vector.load %arg5[%c0_12, %c0_13, %c0_14, %c0_15] : memref<1x4x8x16xf32, #tpu.memory_space<vmem>>, vector<1x4x8x16xf32>
    %31 = vector.shape_cast %30 : vector<1x4x8x16xf32> to vector<4x8x16xf32>
    %32 = vector.shape_cast %29 : vector<4x8x16xf32> to vector<1x4x8x16xf32>
    tpu.vector_store %arg5[%c0_12, %c0_13, %c0_14, %c0_15], %32 {strides = array<i32>} : memref<1x4x8x16xf32, #tpu.memory_space<vmem>>, vector<1x4x8x16xf32>,
    %c0_16 = arith.constant 0 : index
    %c0_17 = arith.constant 0 : index
    %33 = vector.load %arg3[%c0_16, %c0_17] : memref<32x32xf32, #tpu.memory_space<vmem>>, vector<32x32xf32>
    %cst_18 = arith.constant dense<0.000000e+00> : vector<16x32xf32>
    %34 = tpu.matmul %25, %33, %cst_18 {dimension_numbers = #tpu.dot_dimension_numbers<[1], [0], [0], [1], [0, 0, 1, 1], [], []>} : vector<16x32xf32>, vector<32x32xf32>, vector<16x32xf32> -> vector<16x32xf32>
    %35 = vector.shape_cast %34 : vector<16x32xf32> to vector<16x4x8xf32>
    %36 = tpu.transpose %35, [1, 0, 2] : vector<16x4x8xf32> -> vector<4x16x8xf32>
    %c0_19 = arith.constant 0 : index
    %c0_20 = arith.constant 0 : index
    %c0_21 = arith.constant 0 : index
    %c0_22 = arith.constant 0 : index
    %37 = vector.load %arg6[%c0_19, %c0_20, %c0_21, %c0_22] : memref<1x4x16x8xf32, #tpu.memory_space<vmem>>, vector<1x4x16x8xf32>
    %38 = vector.shape_cast %37 : vector<1x4x16x8xf32> to vector<4x16x8xf32>
    %39 = vector.shape_cast %36 : vector<4x16x8xf32> to vector<1x4x16x8xf32>
    tpu.vector_store %arg6[%c0_19, %c0_20, %c0_21, %c0_22], %39 {strides = array<i32>} : memref<1x4x16x8xf32, #tpu.memory_space<vmem>>, vector<1x4x16x8xf32>,
    return
  }
  func.func @transform_0(%arg0: i32) -> (i32, i32, i32) {
    %c0_i32 = arith.constant 0 : i32
    %c0_i32_0 = arith.constant 0 : i32
    %c0_i32_1 = arith.constant 0 : i32
    return %arg0, %c0_i32, %c0_i32_0 : i32, i32, i32
  }
  func.func @transform_1(%arg0: i32) -> (i32, i32) {
    %c0_i32 = arith.constant 0 : i32
    %c0_i32_0 = arith.constant 0 : i32
    %c0_i32_1 = arith.constant 0 : i32
    return %c0_i32, %c0_i32_0 : i32, i32
  }
  func.func @transform_2(%arg0: i32) -> (i32, i32) {
    %c0_i32 = arith.constant 0 : i32
    %c0_i32_0 = arith.constant 0 : i32
    %c0_i32_1 = arith.constant 0 : i32
    return %c0_i32, %c0_i32_0 : i32, i32
  }
  func.func @transform_3(%arg0: i32) -> (i32, i32) {
    %c0_i32 = arith.constant 0 : i32
    %c0_i32_0 = arith.constant 0 : i32
    %c0_i32_1 = arith.constant 0 : i32
    return %c0_i32, %c0_i32_0 : i32, i32
  }
  func.func @transform_4(%arg0: i32) -> (i32, i32, i32, i32) {
    %c0_i32 = arith.constant 0 : i32
    %c0_i32_0 = arith.constant 0 : i32
    %c0_i32_1 = arith.constant 0 : i32
    %c0_i32_2 = arith.constant 0 : i32
    return %arg0, %c0_i32, %c0_i32_0, %c0_i32_1 : i32, i32, i32, i32
  }
  func.func @transform_5(%arg0: i32) -> (i32, i32, i32, i32) {
    %c0_i32 = arith.constant 0 : i32
    %c0_i32_0 = arith.constant 0 : i32
    %c0_i32_1 = arith.constant 0 : i32
    %c0_i32_2 = arith.constant 0 : i32
    return %arg0, %c0_i32, %c0_i32_0, %c0_i32_1 : i32, i32, i32, i32
  }
}

</mosaic_0001>

<llo_original>
// kernel: tpu_custom_call.1
$region0: #{tpu_custom_call.1}
  #allocation0 [shape = 'u32[]', space=smem, size = 0x4, offset = 0x4, fixed_abs, tag = 'smem constant byte address 0x4 - core index']
  #allocation1 [shape = 'u32[144,128]{1,0:T(1,128)}', space=vmem, size = 0x12000, scoped, tag = 'internal scratch']
  %s0 = inlined_call_operand.hbm [shape: f32[2,16,32], index: 0, kind: input, shape index: {}]
  %s1 = inlined_call_operand.hbm [shape: f32[32,32], index: 1, kind: input, shape index: {}]
  %s2 = inlined_call_operand.hbm [shape: f32[32,32], index: 2, kind: input, shape index: {}]
  %s3 = inlined_call_operand.hbm [shape: f32[6,32], index: 3, kind: input, shape index: {}]
  %s4 = inlined_call_operand.hbm [shape: f32[2,4,8,16], index: 4, kind: output, shape index: {0}]
  %s5 = inlined_call_operand.vmem [shape: f32[2,4,16,8], index: 5, kind: output, shape index: {1}]
  %6 = xla_tuple %s4, %s5
  %s7 = sld [smem:[#allocation0]]
  $region73: #{tpu_custom_call.1} parent=0
    _
  %s9 = ssub.s32 1, %s7
  %s10 = scalar_select 0, %s9, %s7
  $region1: #{tpu_custom_call.1} parent=0
    #allocation2 [shape = 'u8[16384]{0}', space=vmem, size = 0x4000, scoped, tag = 'input window, operand 0']
    #allocation3 [shape = 's32[2]{0}', space=sflag, size = 0x8, scoped, tag = 'scoped memory for tpu_custom_call.1']
    #allocation4 [shape = 's32[2]{0}', space=sflag, size = 0x8, scoped, tag = 'scoped memory for tpu_custom_call.1']
    #allocation5 [shape = 'u8[16384]{0}', space=vmem, size = 0x4000, scoped, tag = 'input window, operand 1, single buffered']
    #allocation6 [shape = 's32[1]{0}', space=sflag, size = 0x4, scoped, tag = 'scoped memory for tpu_custom_call.1']
    #allocation7 [shape = 'u8[16384]{0}', space=vmem, size = 0x4000, scoped, tag = 'input window, operand 2, single buffered']
    #allocation8 [shape = 'u8[4096]{0}', space=vmem, size = 0x1000, scoped, tag = 'input window, operand 3, single buffered']
    #allocation9 [shape = 's32[1]{0}', space=sflag, size = 0x4, scoped, tag = 'scoped memory for tpu_custom_call.1']
    #allocation10 [shape = 'u8[32768]{0}', space=vmem, size = 0x8000, scoped, tag = 'output window, operand 0']
    %11 = vsyncpa [#allocation3], 0
    %s12 = scalar_lea.sflag [#allocation3], 1
    %13 = vsyncpa %s12, 0
    %14 = vsyncpa [#allocation6], 0
    %15 = vsyncpa [#allocation9], 0
    %16 = vsyncpa [#allocation4], 0
    %s17 = scalar_lea.sflag [#allocation4], 1
    %18 = vsyncpa %s17, 0
    loop: start=0, step=1, limit=4
    $region2: #{tpu_custom_call.1} parent=1 // loop_pre_header
      _
    $region3: #{tpu_custom_call.1} parent=1 // loop_header
      %s20 = sphi 0, %s24
      %p21 = scmp.ge.s32.totalorder %s20, 4
      %s30 = sphi 0, %s32
      %s33 = sphi 0, %s30
      %s34 = sphi 0, %s33
      %s50 = sphi 0, %s34
      %s54 = sphi 0, %s54
      %s56 = sphi 0, %s54
      %s57 = sphi 0, %s56
      %s71 = sphi 0, %s57
      %s75 = sphi 0, %s75
      %s77 = sphi 0, %s75
      %s78 = sphi 0, %s77
      %s92 = sphi 0, %s78
      %s96 = sphi 0, %s96
      %s98 = sphi 0, %s96
      %s99 = sphi 0, %s98
      %s113 = sphi 0, %s99
      %s119 = sphi 0, %s121
      %s122 = sphi 0, %s119
      %s123 = sphi 0, %s122
      %s139 = sphi 0, %s123
      %s145 = sphi 0, %s147
      %s148 = sphi 0, %s145
      %s149 = sphi 0, %s148
      %s165 = sphi 0, %s149
    $region4: #{tpu_custom_call.1} parent=1 // loop_header_branch
      %23 = sbr.rel (%p21) target = $region8
    $region5: #{tpu_custom_call.1} parent=1 // loop_body
      %s25 = ssub.s32 %s20, 1
      %s26 = ssub.s32 %s20, 2
      %s27 = sadd.s32 %s20, 1
      %s28 = ssub.s32 %s20, %s27
      %p29 = scmp.eq.s32.totalorder %s28, 0
      %s31 = sadd.s32 %s30, 1
      %s32 = scalar_select %p29, %s30, %s31
      %p35 = pneg %p29
      %p36 = scmp.eq.s32.totalorder %s20, 1
      %p37 = por %p35, %p36
      %p38 = scmp.ne.s32.totalorder %s30, %s33
      %p39 = scmp.eq.s32.totalorder %s20, 0
      %p40 = por %p38, %p39
      %p41 = scmp.ne.s32.totalorder %s30, %s33
      %p42 = scmp.eq.s32.totalorder %s25, 1
      %p43 = por %p41, %p42
      %p44 = scmp.ne.s32.totalorder %s33, %s34
      %p45 = scmp.eq.s32.totalorder %s25, 0
      %p46 = por %p44, %p45
      %p47 = scmp.ne.s32.totalorder %s33, %s34
      %p48 = scmp.eq.s32.totalorder %s26, 1
      %p49 = por %p47, %p48
      %p51 = scmp.ne.s32.totalorder %s34, %s50
      %p52 = scmp.eq.s32.totalorder %s26, 0
      %p53 = por %p51, %p52
      %s55 = sadd.s32 %s54, 1
      %p58 = scmp.eq.s32.totalorder %s20, 1
      %p59 = scmp.ne.s32.totalorder %s54, %s56
      %p60 = scmp.eq.s32.totalorder %s20, 0
      %p61 = por %p59, %p60
      %p62 = scmp.ne.s32.totalorder %s54, %s56
      %p63 = scmp.eq.s32.totalorder %s25, 1
      %p64 = por %p62, %p63
      %p65 = scmp.ne.s32.totalorder %s56, %s57
      %p66 = scmp.eq.s32.totalorder %s25, 0
      %p67 = por %p65, %p66
      %p68 = scmp.ne.s32.totalorder %s56, %s57
      %p69 = scmp.eq.s32.totalorder %s26, 1
      %p70 = por %p68, %p69
      %p72 = scmp.ne.s32.totalorder %s57, %s71
      %p73 = scmp.eq.s32.totalorder %s26, 0
      %p74 = por %p72, %p73
      %s76 = sadd.s32 %s75, 1
      %p79 = scmp.eq.s32.totalorder %s20, 1
      %p80 = scmp.ne.s32.totalorder %s75, %s77
      %p81 = scmp.eq.s32.totalorder %s20, 0
      %p82 = por %p80, %p81
      %p83 = scmp.ne.s32.totalorder %s75, %s77
      %p84 = scmp.eq.s32.totalorder %s25, 1
      %p85 = por %p83, %p84
      %p86 = scmp.ne.s32.totalorder %s77, %s78
      %p87 = scmp.eq.s32.totalorder %s25, 0
      %p88 = por %p86, %p87
      %p89 = scmp.ne.s32.totalorder %s77, %s78
      %p90 = scmp.eq.s32.totalorder %s26, 1
      %p91 = por %p89, %p90
      %p93 = scmp.ne.s32.totalorder %s78, %s92
      %p94 = scmp.eq.s32.totalorder %s26, 0
      %p95 = por %p93, %p94
      %s97 = sadd.s32 %s96, 1
      %p100 = scmp.eq.s32.totalorder %s20, 1
      %p101 = scmp.ne.s32.totalorder %s96, %s98
      %p102 = scmp.eq.s32.totalorder %s20, 0
      %p103 = por %p101, %p102
      %p104 = scmp.ne.s32.totalorder %s96, %s98
      %p105 = scmp.eq.s32.totalorder %s25, 1
      %p106 = por %p104, %p105
      %p107 = scmp.ne.s32.totalorder %s98, %s99
      %p108 = scmp.eq.s32.totalorder %s25, 0
      %p109 = por %p107, %p108
      %p110 = scmp.ne.s32.totalorder %s98, %s99
      %p111 = scmp.eq.s32.totalorder %s26, 1
      %p112 = por %p110, %p111
      %p114 = scmp.ne.s32.totalorder %s99, %s113
      %p115 = scmp.eq.s32.totalorder %s26, 0
      %p116 = por %p114, %p115
      %s117 = ssub.s32 %s20, %s27
      %p118 = scmp.eq.s32.totalorder %s117, 0
      %s120 = sadd.s32 %s119, 1
      %s121 = scalar_select %p118, %s119, %s120
      %p124 = pneg %p118
      %p125 = scmp.eq.s32.totalorder %s20, 1
      %p126 = por %p124, %p125
      %p127 = scmp.ne.s32.totalorder %s119, %s122
      %p128 = scmp.eq.s32.totalorder %s20, 0
      %p129 = por %p127, %p128
      %p130 = scmp.ne.s32.totalorder %s119, %s122
      %p131 = scmp.eq.s32.totalorder %s25, 1
      %p132 = por %p130, %p131
      %p133 = scmp.ne.s32.totalorder %s122, %s123
      %p134 = scmp.eq.s32.totalorder %s25, 0
      %p135 = por %p133, %p134
      %p136 = scmp.ne.s32.totalorder %s122, %s123
      %p137 = scmp.eq.s32.totalorder %s26, 1
      %p138 = por %p136, %p137
      %p140 = scmp.ne.s32.totalorder %s123, %s139
      %p141 = scmp.eq.s32.totalorder %s26, 0
      %p142 = por %p140, %p141
      %s143 = ssub.s32 %s20, %s27
      %p144 = scmp.eq.s32.totalorder %s143, 0
      %s146 = sadd.s32 %s145, 1
      %s147 = scalar_select %p144, %s145, %s146
      %p150 = pneg %p144
      %p151 = scmp.eq.s32.totalorder %s20, 1
      %p152 = por %p150, %p151
      %p153 = scmp.ne.s32.totalorder %s145, %s148
      %p154 = scmp.eq.s32.totalorder %s20, 0
      %p155 = por %p153, %p154
      %p156 = scmp.ne.s32.totalorder %s145, %s148
      %p157 = scmp.eq.s32.totalorder %s25, 1
      %p158 = por %p156, %p157
      %p159 = scmp.ne.s32.totalorder %s148, %s149
      %p160 = scmp.eq.s32.totalorder %s25, 0
      %p161 = por %p159, %p160
      %p162 = scmp.ne.s32.totalorder %s148, %s149
      %p163 = scmp.eq.s32.totalorder %s26, 1
      %p164 = por %p162, %p163
      %p166 = scmp.ne.s32.totalorder %s149, %s165
      %p167 = scmp.eq.s32.totalorder %s26, 0
      %p168 = por %p166, %p167
      %p169 = scmp.le.s32.totalorder 1, %s20
      %p170 = scmp.lt.s32.totalorder %s20, 3
      %p171 = pnand %p169, %p170
      %p172 = pneg %p171
      // Predicated region
      $region9: #{tpu_custom_call.1} parent=5 // pred_check
        _
      $region10: #{tpu_custom_call.1} parent=5 // pred_check_branch
        %174 = sbr.rel (%p171) target = $region12
      $region11: #{tpu_custom_call.1} parent=5 // pred_region
        %s175 = ssub.s32 %s20, 1
        // Predicated region
        $region13: #{tpu_custom_call.1} parent=11 // pred_check
          %p176 = pneg %p67
        $region14: #{tpu_custom_call.1} parent=11 // pred_check_branch
          %178 = sbr.rel (%p176) target = $region16
        $region15: #{tpu_custom_call.1} parent=11 // pred_region
          %s180 = ssub.s32 512, 512
          %181 = vsyncadd [#allocation6], %s180
          %s182 = sshll.u32 [#allocation5], 4
          %s183 = int_to_ptr.vmem [resolvable:$true] %s182
          %188 = dma.hbm_to_vmem [thread:$0]  %s1, 512, %s183, [#allocation6], 128, 128, 8
        $region16: #{tpu_custom_call.1} parent=11 // pred_fallthru
          _
        // Predicated region
        $region17: #{tpu_custom_call.1} parent=11 // pred_check
          %p189 = pneg %p88
        $region18: #{tpu_custom_call.1} parent=11 // pred_check_branch
          %191 = sbr.rel (%p189) target = $region20
        $region19: #{tpu_custom_call.1} parent=11 // pred_region
          %s193 = ssub.s32 512, 512
          %194 = vsyncadd [#allocation6], %s193
          %s195 = sshll.u32 [#allocation7], 4
          %s196 = int_to_ptr.vmem [resolvable:$true] %s195
          %201 = dma.hbm_to_vmem [thread:$0]  %s2, 512, %s196, [#allocation6], 128, 128, 8
        $region20: #{tpu_custom_call.1} parent=11 // pred_fallthru
          _
        // Predicated region
        $region21: #{tpu_custom_call.1} parent=11 // pred_check
          %p202 = pneg %p109
        $region22: #{tpu_custom_call.1} parent=11 // pred_check_branch
          %204 = sbr.rel (%p202) target = $region24
        $region23: #{tpu_custom_call.1} parent=11 // pred_region
          %s206 = ssub.s32 128, 128
          %207 = vsyncadd [#allocation9], %s206
          %s209 = sshll.u32 [#allocation8], 4
          %s210 = int_to_ptr.vmem [resolvable:$true] %s209
          %212 = dma.hbm_to_vmem [thread:$0]  %s3, 128, %s210, [#allocation9]
        $region24: #{tpu_custom_call.1} parent=11 // pred_fallthru
          _
      $region12: #{tpu_custom_call.1} parent=5 // pred_fallthru
        _
      %p213 = scmp.lt.s32.totalorder %s20, 2
      // Predicated region
      $region25: #{tpu_custom_call.1} parent=5 // pred_check
        %p214 = pneg %p213
      $region26: #{tpu_custom_call.1} parent=5 // pred_check_branch
        %216 = sbr.rel (%p214) target = $region28
      $region27: #{tpu_custom_call.1} parent=5 // pred_region
        // Predicated region
        $region29: #{tpu_custom_call.1} parent=27 // pred_check
          %p217 = pneg %p40
        $region30: #{tpu_custom_call.1} parent=27 // pred_check_branch
          %219 = sbr.rel (%p217) target = $region32
        $region31: #{tpu_custom_call.1} parent=27 // pred_region
          %s220 = sand.u32 %s30, 1
          %s221 = scalar_lea.sflag [#allocation3], %s220
          %s222 = sand.u32 %s30, 1
          %s223 = smul.addr %s222, 16
          %s224 = scalar_lea.vmem [#allocation2], %s223
          %s226 = ssub.s32 256, 256
          %227 = vsyncadd %s221, %s226
          %s228 = smul.addr %s20, 2
          %s229 = smul.addr %s228, 128
          %s230 = scalar_lea.hbm %s0, %s229
          %s231 = sshll.u32 %s224, 4
          %s232 = int_to_ptr.vmem [resolvable:$true] %s231
          %237 = dma.hbm_to_vmem [thread:$0]  %s230, 256, %s232, %s221, 128, 128, 8
        $region32: #{tpu_custom_call.1} parent=27 // pred_fallthru
          _
      $region28: #{tpu_custom_call.1} parent=5 // pred_fallthru
        _
      %p238 = scmp.le.s32.totalorder 1, %s20
      %p239 = scmp.lt.s32.totalorder %s20, 3
      %p240 = pnand %p238, %p239
      %p241 = pneg %p240
      // Predicated region
      $region33: #{tpu_custom_call.1} parent=5 // pred_check
        _
      $region34: #{tpu_custom_call.1} parent=5 // pred_check_branch
        %243 = sbr.rel (%p240) target = $region36
      $region35: #{tpu_custom_call.1} parent=5 // pred_region
        %s244 = ssub.s32 %s20, 1
        %s245 = sand.u32 %s33, 1
        %s246 = scalar_lea.sflag [#allocation3], %s245
        %s247 = sand.u32 %s33, 1
        %s248 = smul.addr %s247, 16
        %s249 = scalar_lea.vmem [#allocation2], %s248
        // Predicated region
        $region37: #{tpu_custom_call.1} parent=35 // pred_check
          %p250 = pneg %p46
        $region38: #{tpu_custom_call.1} parent=35 // pred_check_branch
          %252 = sbr.rel (%p250) target = $region40
        $region39: #{tpu_custom_call.1} parent=35 // pred_region
          %253 = dma.done %s246, 256
        $region40: #{tpu_custom_call.1} parent=35 // pred_fallthru
          _
        // Predicated region
        $region41: #{tpu_custom_call.1} parent=35 // pred_check
          %p254 = pneg %p67
        $region42: #{tpu_custom_call.1} parent=35 // pred_check_branch
          %256 = sbr.rel (%p254) target = $region44
        $region43: #{tpu_custom_call.1} parent=35 // pred_region
          %257 = dma.done [#allocation6], 512
        $region44: #{tpu_custom_call.1} parent=35 // pred_fallthru
          _
        // Predicated region
        $region45: #{tpu_custom_call.1} parent=35 // pred_check
          %p258 = pneg %p88
        $region46: #{tpu_custom_call.1} parent=35 // pred_check_branch
          %260 = sbr.rel (%p258) target = $region48
        $region47: #{tpu_custom_call.1} parent=35 // pred_region
          %261 = dma.done [#allocation6], 512
        $region48: #{tpu_custom_call.1} parent=35 // pred_fallthru
          _
        // Predicated region
        $region49: #{tpu_custom_call.1} parent=35 // pred_check
          %p262 = pneg %p109
        $region50: #{tpu_custom_call.1} parent=35 // pred_check_branch
          %264 = sbr.rel (%p262) target = $region52
        $region51: #{tpu_custom_call.1} parent=35 // pred_region
          %265 = dma.done [#allocation9], 128
        $region52: #{tpu_custom_call.1} parent=35 // pred_fallthru
          _
        %s266 = sand.u32 %s33, 1
        %s267 = scalar_lea.sflag [#allocation3], %s266
        %s268 = sand.u32 %s33, 1
        %s269 = smul.addr %s268, 16
        %s270 = scalar_lea.vmem [#allocation2], %s269
        %p271 = pneg %p46
        %p272 = pneg %p43
        %p273 = pneg %p67
        %p274 = pneg %p64
        %p275 = pneg %p88
        %p276 = pneg %p85
        %p277 = pneg %p109
        %p278 = pneg %p106
        %p279 = pneg %p135
        %p280 = pneg %p132
        %s281 = sand.u32 %s122, 1
        %s282 = scalar_lea.sflag [#allocation4], %s281
        %s283 = sand.u32 %s122, 1
        %s284 = smul.addr %s283, 32
        %s285 = scalar_lea.vmem [#allocation10], %s284
        %p286 = pneg %p161
        %p287 = pneg %p158
        %p288 = scmp.lt.s32.totalorder %s25, 1
        %s289 = scalar_select %p288, %s25, 1
        %s290 = smul.addr %s289, 8
        %s291 = smul.addr %s290, 8
        %s292 = scalar_lea.vmem %s5, %s291
        %p293 = scmp.lt.s32.totalorder %s25, 1
        %s294 = scalar_select %p293, %s25, 1
        %s295 = smul.addr %s294, 8
        %s296 = smul.addr %s295, 8
        %s297 = scalar_lea.vmem %s5, %s296
        %v298 = vld [vmem:[%s249] sm:$0xff]
        %v299 = vld [vmem:[%s249 + $0x8] sm:$0xff]
        %v300 = vld [vmem:[#allocation8] sm:$0x1]
        %v301 = vld [vmem:[#allocation8 + $0x1] sm:$0x1]
        %vm302 = vcmask 261120
        %v303 = vsel %vm302, %v298, 0.0
        %304 = vadd.xlane.f32.xlu0 %v303
        %v305 = vpop.xlane.xlu0 %304
        %v306 = vsel %vm302, %v299, 0.0
        %307 = vadd.xlane.f32.xlu0 %v306
        %v308 = vpop.xlane.xlu0 %307
        %v309 = vrcp.pop 32.0
        %v310 = vmul.f32 %v305, %v309
        %v311 = vmul.f32 %v308, %v309
        %v312 = vsub.f32 %v298, %v310
        %v313 = vsub.f32 %v299, %v311
        %v314 = vmul.f32 %v312, %v312
        %v315 = vmul.f32 %v313, %v313
        %v316 = vsel %vm302, %v314, 0.0
        %317 = vadd.xlane.f32.xlu0 %v316
        %v318 = vpop.xlane.xlu0 %317
        %v319 = vsel %vm302, %v315, 0.0
        %320 = vadd.xlane.f32.xlu0 %v319
        %v321 = vpop.xlane.xlu0 %320
        %v322 = vmul.f32 %v318, %v309
        %v323 = vmul.f32 %v321, %v309
        %v324 = vadd.f32 %v322, 1e-05
        %v325 = vadd.f32 %v323, 1e-05
        %v326 = vrsqrt.pop %v324
        %v327 = vrsqrt.pop %v325
        %v328 = vmul.f32 %v312, %v326
        %v329 = vmul.f32 %v313, %v327
        %v330 = vlaneseq
        %v331 = vshrl.u32 %v330, 7
        %v332 = vsub.s32 0, %v331
        %v333 = vrot.slane %v300, %v332
        %v334 = vmul.f32 %v328, %v333
        %v335 = vmul.f32 %v329, %v333
        %v336 = vlaneseq
        %v337 = vshrl.u32 %v336, 7
        %v338 = vsub.s32 0, %v337
        %v339 = vrot.slane %v301, %v338
        %v340 = vadd.f32 %v334, %v339
        %v341 = vadd.f32 %v335, %v339
        %v342 = vld [vmem:[#allocation5] sm:$0xff]
        %v343 = vld [vmem:[#allocation5 + $0x8] sm:$0xff]
        %v344 = vld [vmem:[#allocation5 + $0x10] sm:$0xff]
        %v345 = vld [vmem:[#allocation5 + $0x18] sm:$0xff]
        %v347 = vsel %vm302, %v342, 0
        %v350 = vsel %vm302, %v343, 0
        %v353 = vsel %vm302, %v344, 0
        %v356 = vsel %vm302, %v345, 0
        %v359 = vsel %vm302, %v340, 0
        %v362 = vsel %vm302, %v341, 0
        %364 = vmatprep.subr.mxu0 0.0
        %365 = vmatpush1.xpose.msra.mxu0 0.0
        %366 = vmatprep.subr.mxu0 0.0
        %367 = vmatpush1.xpose.msra.mxu0 0.0
        %368 = vmatprep.subr.mxu0 0.0
        %369 = vmatpush1.xpose.msra.mxu0 0.0
        %370 = vmatprep.subr.mxu0 0.0
        %371 = vmatpush1.xpose.msra.mxu0 0.0
        %372 = vmatprep.subr.mxu0 0.0
        %373 = vmatpush1.xpose.msra.mxu0 0.0
        %374 = vmatprep.subr.mxu0 0.0
        %375 = vmatpush1.xpose.msra.mxu0 0.0
        %376 = vmatprep.subr.mxu0 0.0
        %377 = vmatpush1.xpose.msra.mxu0 0.0
        %378 = vmatprep.subr.mxu0 0.0
        %379 = vmatpush1.xpose.msra.mxu0 0.0
        %380 = vmatprep.subr.mxu0 0.0
        %381 = vmatpush1.xpose.msra.mxu0 0.0
        %382 = vmatprep.subr.mxu0 0.0
        %383 = vmatpush1.xpose.msra.mxu0 0.0
        %384 = vmatprep.subr.mxu0 0.0
        %385 = vmatpush1.xpose.msra.mxu0 0.0
        %386 = vmatprep.subr.mxu0 0.0
        %387 = vmatpush1.xpose.msra.mxu0 0.0
        %388 = vmatprep.subr.mxu0 0.0
        %389 = vmatpush1.xpose.msra.mxu0 0.0
        %390 = vmatprep.subr.mxu0 0.0
        %391 = vmatpush1.xpose.msra.mxu0 0.0
        %392 = vmatprep.subr.mxu0 0.0
        %393 = vmatpush1.xpose.msra.mxu0 %v362
        %394 = vmatprep.subr.mxu0 0.0
        %395 = vmatpush1.xpose.msra.mxu0 %v359
        %396 = vmatprep.subr.mxu0 0.0
        %397 = vmatpush2.xpose.msra.mxu0 0.0
        %398 = vmatprep.subr.mxu0 0.0
        %399 = vmatpush2.xpose.msra.mxu0 0.0
        %400 = vmatprep.subr.mxu0 0.0
        %401 = vmatpush2.xpose.msra.mxu0 0.0
        %402 = vmatprep.subr.mxu0 0.0
        %403 = vmatpush2.xpose.msra.mxu0 0.0
        %404 = vmatprep.subr.mxu0 0.0
        %405 = vmatpush2.xpose.msra.mxu0 0.0
        %406 = vmatprep.subr.mxu0 0.0
        %407 = vmatpush2.xpose.msra.mxu0 0.0
        %408 = vmatprep.subr.mxu0 0.0
        %409 = vmatpush2.xpose.msra.mxu0 0.0
        %410 = vmatprep.subr.mxu0 0.0
        %411 = vmatpush2.xpose.msra.mxu0 0.0
        %412 = vmatprep.subr.mxu0 0.0
        %413 = vmatpush2.xpose.msra.mxu0 0.0
        %414 = vmatprep.subr.mxu0 0.0
        %415 = vmatpush2.xpose.msra.mxu0 0.0
        %416 = vmatprep.subr.mxu0 0.0
        %417 = vmatpush2.xpose.msra.mxu0 0.0
        %418 = vmatprep.subr.mxu0 0.0
        %419 = vmatpush2.xpose.msra.mxu0 0.0
        %420 = vmatprep.subr.mxu0 0.0
        %421 = vmatpush2.xpose.msra.mxu0 0.0
        %422 = vmatprep.subr.mxu0 0.0
        %423 = vmatpush2.xpose.msra.mxu0 0.0
        %424 = vmatprep.subr.mxu0 0.0
        %425 = vmatpush2.xpose.msra.mxu0 0.0
        %426 = vmatprep.subr.mxu0 0.0
        %427 = vmatpush2.xpose.msra.mxu0 0.0
        %428 = vmatprep.mubr.f32.mxu0 0.0
        %429 = vmatmul.mubr.f32.gmra.mxu0 %v347
        %v430 = vpop.f32.mrf.mxu0
        %v431 = vadd.f32 0.0, %v430
        %v432 = vpop.f32.mrf.mxu0
        %433 = vmatprep.mubr.f32.mxu0 0.0
        %434 = vmatmul.mubr.f32.gmra.mxu0 %v350
        %v435 = vpop.f32.mrf.mxu0
        %v436 = vadd.f32 0.0, %v435
        %v437 = vpop.f32.mrf.mxu0
        %438 = vmatprep.mubr.f32.mxu0 0.0
        %439 = vmatmul.mubr.f32.gmra.mxu0 %v353
        %v440 = vpop.f32.mrf.mxu0
        %v441 = vadd.f32 0.0, %v440
        %v442 = vpop.f32.mrf.mxu0
        %443 = vmatprep.mubr.f32.mxu0 0.0
        %444 = vmatmul.mubr.f32.gmra.mxu0 %v356
        %v445 = vpop.f32.mrf.mxu0
        %v446 = vadd.f32 0.0, %v445
        %v447 = vpop.f32.mrf.mxu0
        %448 = vdwg.mxu0
        %vm449 = vcmask 130048
        %450 = vst.msk [vmem:[%s285] sm:$0xff] %vm449, %v431
        %451 = vst.msk [vmem:[%s285 + $0x8] sm:$0xff] %vm449, %v436
        %452 = vst.msk [vmem:[%s285 + $0x10] sm:$0xff] %vm449, %v441
        %453 = vst.msk [vmem:[%s285 + $0x18] sm:$0xff] %vm449, %v446
        %v454 = vld [vmem:[#allocation7] sm:$0xff]
        %v455 = vld [vmem:[#allocation7 + $0x8] sm:$0xff]
        %v456 = vld [vmem:[#allocation7 + $0x10] sm:$0xff]
        %v457 = vld [vmem:[#allocation7 + $0x18] sm:$0xff]
        %458 = vmatprep.subr.mxu0 0.0
        %459 = vmatpush1.msra.mxu0 0.0
        %460 = vmatprep.subr.mxu0 0.0
        %461 = vmatpush1.msra.mxu0 0.0
        %462 = vmatprep.subr.mxu0 0.0
        %463 = vmatpush1.msra.mxu0 0.0
        %464 = vmatprep.subr.mxu0 0.0
        %465 = vmatpush1.msra.mxu0 0.0
        %466 = vmatprep.subr.mxu0 0.0
        %467 = vmatpush1.msra.mxu0 0.0
        %468 = vmatprep.subr.mxu0 0.0
        %469 = vmatpush1.msra.mxu0 0.0
        %470 = vmatprep.subr.mxu0 0.0
        %471 = vmatpush1.msra.mxu0 0.0
        %472 = vmatprep.subr.mxu0 0.0
        %473 = vmatpush1.msra.mxu0 0.0
        %474 = vmatprep.subr.mxu0 0.0
        %475 = vmatpush1.msra.mxu0 0.0
        %476 = vmatprep.subr.mxu0 0.0
        %477 = vmatpush1.msra.mxu0 0.0
        %478 = vmatprep.subr.mxu0 0.0
        %479 = vmatpush1.msra.mxu0 0.0
        %480 = vmatprep.subr.mxu0 0.0
        %481 = vmatpush1.msra.mxu0 0.0
        %482 = vmatprep.subr.mxu0 0.0
        %483 = vmatpush1.msra.mxu0 %v457
        %484 = vmatprep.subr.mxu0 0.0
        %485 = vmatpush1.msra.mxu0 %v456
        %486 = vmatprep.subr.mxu0 0.0
        %487 = vmatpush1.msra.mxu0 %v455
        %488 = vmatprep.subr.mxu0 0.0
        %489 = vmatpush1.msra.mxu0 %v454
        %490 = vmatprep.subr.mxu0 0.0
        %491 = vmatpush2.msra.mxu0 0.0
        %492 = vmatprep.subr.mxu0 0.0
        %493 = vmatpush2.msra.mxu0 0.0
        %494 = vmatprep.subr.mxu0 0.0
        %495 = vmatpush2.msra.mxu0 0.0
        %496 = vmatprep.subr.mxu0 0.0
        %497 = vmatpush2.msra.mxu0 0.0
        %498 = vmatprep.subr.mxu0 0.0
        %499 = vmatpush2.msra.mxu0 0.0
        %500 = vmatprep.subr.mxu0 0.0
        %501 = vmatpush2.msra.mxu0 0.0
        %502 = vmatprep.subr.mxu0 0.0
        %503 = vmatpush2.msra.mxu0 0.0
        %504 = vmatprep.subr.mxu0 0.0
        %505 = vmatpush2.msra.mxu0 0.0
        %506 = vmatprep.subr.mxu0 0.0
        %507 = vmatpush2.msra.mxu0 0.0
        %508 = vmatprep.subr.mxu0 0.0
        %509 = vmatpush2.msra.mxu0 0.0
        %510 = vmatprep.subr.mxu0 0.0
        %511 = vmatpush2.msra.mxu0 0.0
        %512 = vmatprep.subr.mxu0 0.0
        %513 = vmatpush2.msra.mxu0 0.0
        %514 = vmatprep.subr.mxu0 0.0
        %515 = vmatpush2.msra.mxu0 0.0
        %516 = vmatprep.subr.mxu0 0.0
        %517 = vmatpush2.msra.mxu0 0.0
        %518 = vmatprep.subr.mxu0 0.0
        %519 = vmatpush2.msra.mxu0 0.0
        %520 = vmatprep.subr.mxu0 0.0
        %521 = vmatpush2.msra.mxu0 0.0
        %522 = vmatprep.mubr.f32.mxu0 0.0
        %523 = vmatmul.mubr.f32.gmra.mxu0 %v359
        %v524 = vpop.f32.mrf.mxu0
        %v525 = vadd.f32 0.0, %v524
        %v526 = vpop.f32.mrf.mxu0
        %527 = vmatprep.mubr.f32.mxu0 0.0
        %528 = vmatmul.mubr.f32.gmra.mxu0 %v362
        %v529 = vpop.f32.mrf.mxu0
        %v530 = vadd.f32 0.0, %v529
        %v531 = vpop.f32.mrf.mxu0
        %532 = vdwg.mxu0
        %535 = vrot.lane.b32.xlu0 %v525, 120
        %v536 = vpop.permute.xlu0 %535
        %537 = vrot.lane.b32.xlu0 %v530, 120
        %v538 = vpop.permute.xlu0 %537
        %541 = vrot.lane.b32.xlu0 %v525, 112
        %v542 = vpop.permute.xlu0 %541
        %543 = vrot.lane.b32.xlu0 %v530, 112
        %v544 = vpop.permute.xlu0 %543
        %547 = vrot.lane.b32.xlu0 %v525, 104
        %v548 = vpop.permute.xlu0 %547
        %549 = vrot.lane.b32.xlu0 %v530, 104
        %v550 = vpop.permute.xlu0 %549
        %v553 = vcombine.low %v525, %v542
        %v554 = vcombine.high %v525, %v542
        %v556 = vunpack.c.l.s4 1983009808
        %v557 = vunpack.c.0.s8 %v556
        %v558 = vlaneseq
        %v559 = vshrl.u32 %v558, 7
        %v560 = vsub.s32 %v557, %v559
        %v561 = vrot.slane %v553, %v560
        %v563 = vunpack.c.l.s4 1983009808
        %v564 = vunpack.c.0.s8 %v563
        %v565 = vlaneseq
        %v566 = vshrl.u32 %v565, 7
        %v567 = vsub.s32 %v564, %v566
        %v568 = vrot.slane %v554, %v567
        %v569 = vcombine.low %v536, %v548
        %v570 = vcombine.high %v536, %v548
        %v572 = vunpack.c.l.s4 1983009808
        %v573 = vunpack.c.0.s8 %v572
        %v574 = vlaneseq
        %v575 = vshrl.u32 %v574, 7
        %v576 = vsub.s32 %v573, %v575
        %v577 = vrot.slane %v569, %v576
        %v579 = vunpack.c.l.s4 1983009808
        %v580 = vunpack.c.0.s8 %v579
        %v581 = vlaneseq
        %v582 = vshrl.u32 %v581, 7
        %v583 = vsub.s32 %v580, %v582
        %v584 = vrot.slane %v570, %v583
        %v585 = vcombine.low %v561, %v577
        %v586 = vcombine.high %v561, %v577
        %v588 = vunpack.c.l.s4 1934713408
        %v589 = vunpack.c.0.s8 %v588
        %v590 = vlaneseq
        %v591 = vshrl.u32 %v590, 7
        %v592 = vsub.s32 %v589, %v591
        %v593 = vrot.slane %v585, %v592
        %v595 = vunpack.c.l.s4 1934713408
        %v596 = vunpack.c.0.s8 %v595
        %v597 = vlaneseq
        %v598 = vshrl.u32 %v597, 7
        %v599 = vsub.s32 %v596, %v598
        %v600 = vrot.slane %v586, %v599
        %v601 = vcombine.low %v568, %v584
        %v602 = vcombine.high %v568, %v584
        %v604 = vunpack.c.l.s4 1934713408
        %v605 = vunpack.c.0.s8 %v604
        %v606 = vlaneseq
        %v607 = vshrl.u32 %v606, 7
        %v608 = vsub.s32 %v605, %v607
        %v609 = vrot.slane %v601, %v608
        %v611 = vunpack.c.l.s4 1934713408
        %v612 = vunpack.c.0.s8 %v611
        %v613 = vlaneseq
        %v614 = vshrl.u32 %v613, 7
        %v615 = vsub.s32 %v612, %v614
        %v616 = vrot.slane %v602, %v615
        %v617 = vcombine.high %v593, 0.0
        %v618 = vcombine.high %v600, 0.0
        %v619 = vcombine.high %v609, 0.0
        %v620 = vcombine.high %v616, 0.0
        %v621 = vcombine.low %v530, %v544
        %v622 = vcombine.high %v530, %v544
        %v624 = vunpack.c.l.s4 1983009808
        %v625 = vunpack.c.0.s8 %v624
        %v626 = vlaneseq
        %v627 = vshrl.u32 %v626, 7
        %v628 = vsub.s32 %v625, %v627
        %v629 = vrot.slane %v621, %v628
        %v631 = vunpack.c.l.s4 1983009808
        %v632 = vunpack.c.0.s8 %v631
        %v633 = vlaneseq
        %v634 = vshrl.u32 %v633, 7
        %v635 = vsub.s32 %v632, %v634
        %v636 = vrot.slane %v622, %v635
        %v637 = vcombine.low %v538, %v550
        %v638 = vcombine.high %v538, %v550
        %v640 = vunpack.c.l.s4 1983009808
        %v641 = vunpack.c.0.s8 %v640
        %v642 = vlaneseq
        %v643 = vshrl.u32 %v642, 7
        %v644 = vsub.s32 %v641, %v643
        %v645 = vrot.slane %v637, %v644
        %v647 = vunpack.c.l.s4 1983009808
        %v648 = vunpack.c.0.s8 %v647
        %v649 = vlaneseq
        %v650 = vshrl.u32 %v649, 7
        %v651 = vsub.s32 %v648, %v650
        %v652 = vrot.slane %v638, %v651
        %v653 = vcombine.low %v629, %v645
        %v654 = vcombine.high %v629, %v645
        %v656 = vunpack.c.l.s4 1934713408
        %v657 = vunpack.c.0.s8 %v656
        %v658 = vlaneseq
        %v659 = vshrl.u32 %v658, 7
        %v660 = vsub.s32 %v657, %v659
        %v661 = vrot.slane %v653, %v660
        %v663 = vunpack.c.l.s4 1934713408
        %v664 = vunpack.c.0.s8 %v663
        %v665 = vlaneseq
        %v666 = vshrl.u32 %v665, 7
        %v667 = vsub.s32 %v664, %v666
        %v668 = vrot.slane %v654, %v667
        %v669 = vcombine.low %v636, %v652
        %v670 = vcombine.high %v636, %v652
        %v672 = vunpack.c.l.s4 1934713408
        %v673 = vunpack.c.0.s8 %v672
        %v674 = vlaneseq
        %v675 = vshrl.u32 %v674, 7
        %v676 = vsub.s32 %v673, %v675
        %v677 = vrot.slane %v669, %v676
        %v679 = vunpack.c.l.s4 1934713408
        %v680 = vunpack.c.0.s8 %v679
        %v681 = vlaneseq
        %v682 = vshrl.u32 %v681, 7
        %v683 = vsub.s32 %v680, %v682
        %v684 = vrot.slane %v670, %v683
        %v685 = vcombine.high %v661, 0.0
        %v686 = vcombine.high %v668, 0.0
        %v687 = vcombine.high %v677, 0.0
        %v688 = vcombine.high %v684, 0.0
        %v689 = vcombine.low %v593, %v600
        %v691 = vunpack.c.l.s4 1983009808
        %v692 = vunpack.c.0.s8 %v691
        %v693 = vlaneseq
        %v694 = vshrl.u32 %v693, 7
        %v695 = vsub.s32 %v692, %v694
        %v696 = vrot.slane %v689, %v695
        %v697 = vcombine.low %v617, %v618
        %v699 = vunpack.c.l.s4 1983009808
        %v700 = vunpack.c.0.s8 %v699
        %v701 = vlaneseq
        %v702 = vshrl.u32 %v701, 7
        %v703 = vsub.s32 %v700, %v702
        %v704 = vrot.slane %v697, %v703
        %v705 = vcombine.low %v609, %v616
        %v707 = vunpack.c.l.s4 1983009808
        %v708 = vunpack.c.0.s8 %v707
        %v709 = vlaneseq
        %v710 = vshrl.u32 %v709, 7
        %v711 = vsub.s32 %v708, %v710
        %v712 = vrot.slane %v705, %v711
        %v713 = vcombine.low %v619, %v620
        %v715 = vunpack.c.l.s4 1983009808
        %v716 = vunpack.c.0.s8 %v715
        %v717 = vlaneseq
        %v718 = vshrl.u32 %v717, 7
        %v719 = vsub.s32 %v716, %v718
        %v720 = vrot.slane %v713, %v719
        %v721 = vcombine.low %v696, %v704
        %v722 = vcombine.high %v696, %v704
        %v724 = vunpack.c.l.s4 1934713408
        %v725 = vunpack.c.0.s8 %v724
        %v726 = vlaneseq
        %v727 = vshrl.u32 %v726, 7
        %v728 = vsub.s32 %v725, %v727
        %v729 = vrot.slane %v721, %v728
        %v731 = vunpack.c.l.s4 1934713408
        %v732 = vunpack.c.0.s8 %v731
        %v733 = vlaneseq
        %v734 = vshrl.u32 %v733, 7
        %v735 = vsub.s32 %v732, %v734
        %v736 = vrot.slane %v722, %v735
        %v737 = vcombine.low %v712, %v720
        %v738 = vcombine.high %v712, %v720
        %v740 = vunpack.c.l.s4 1934713408
        %v741 = vunpack.c.0.s8 %v740
        %v742 = vlaneseq
        %v743 = vshrl.u32 %v742, 7
        %v744 = vsub.s32 %v741, %v743
        %v745 = vrot.slane %v737, %v744
        %v747 = vunpack.c.l.s4 1934713408
        %v748 = vunpack.c.0.s8 %v747
        %v749 = vlaneseq
        %v750 = vshrl.u32 %v749, 7
        %v751 = vsub.s32 %v748, %v750
        %v752 = vrot.slane %v738, %v751
        %v753 = vcombine.low %v729, %v745
        %v754 = vcombine.high %v729, %v745
        %v755 = vcombine.low %v736, %v752
        %v756 = vcombine.high %v736, %v752
        %v757 = vcombine.low %v661, %v668
        %v759 = vunpack.c.l.s4 1983009808
        %v760 = vunpack.c.0.s8 %v759
        %v761 = vlaneseq
        %v762 = vshrl.u32 %v761, 7
        %v763 = vsub.s32 %v760, %v762
        %v764 = vrot.slane %v757, %v763
        %v765 = vcombine.low %v685, %v686
        %v767 = vunpack.c.l.s4 1983009808
        %v768 = vunpack.c.0.s8 %v767
        %v769 = vlaneseq
        %v770 = vshrl.u32 %v769, 7
        %v771 = vsub.s32 %v768, %v770
        %v772 = vrot.slane %v765, %v771
        %v773 = vcombine.low %v677, %v684
        %v775 = vunpack.c.l.s4 1983009808
        %v776 = vunpack.c.0.s8 %v775
        %v777 = vlaneseq
        %v778 = vshrl.u32 %v777, 7
        %v779 = vsub.s32 %v776, %v778
        %v780 = vrot.slane %v773, %v779
        %v781 = vcombine.low %v687, %v688
        %v783 = vunpack.c.l.s4 1983009808
        %v784 = vunpack.c.0.s8 %v783
        %v785 = vlaneseq
        %v786 = vshrl.u32 %v785, 7
        %v787 = vsub.s32 %v784, %v786
        %v788 = vrot.slane %v781, %v787
        %v789 = vcombine.low %v764, %v772
        %v790 = vcombine.high %v764, %v772
        %v792 = vunpack.c.l.s4 1934713408
        %v793 = vunpack.c.0.s8 %v792
        %v794 = vlaneseq
        %v795 = vshrl.u32 %v794, 7
        %v796 = vsub.s32 %v793, %v795
        %v797 = vrot.slane %v789, %v796
        %v799 = vunpack.c.l.s4 1934713408
        %v800 = vunpack.c.0.s8 %v799
        %v801 = vlaneseq
        %v802 = vshrl.u32 %v801, 7
        %v803 = vsub.s32 %v800, %v802
        %v804 = vrot.slane %v790, %v803
        %v805 = vcombine.low %v780, %v788
        %v806 = vcombine.high %v780, %v788
        %v808 = vunpack.c.l.s4 1934713408
        %v809 = vunpack.c.0.s8 %v808
        %v810 = vlaneseq
        %v811 = vshrl.u32 %v810, 7
        %v812 = vsub.s32 %v809, %v811
        %v813 = vrot.slane %v805, %v812
        %v815 = vunpack.c.l.s4 1934713408
        %v816 = vunpack.c.0.s8 %v815
        %v817 = vlaneseq
        %v818 = vshrl.u32 %v817, 7
        %v819 = vsub.s32 %v816, %v818
        %v820 = vrot.slane %v806, %v819
        %v821 = vcombine.low %v797, %v813
        %v822 = vcombine.high %v797, %v813
        %v823 = vcombine.low %v804, %v820
        %v824 = vcombine.high %v804, %v820
        %vm825 = vcmask 64512
        %826 = vst.msk [vmem:[%s297] sm:$0xff] %vm825, %v753
        %827 = vst.msk [vmem:[%s297 + $0x8] sm:$0xff] %vm825, %v821
        %828 = vst.msk [vmem:[%s297 + $0x10] sm:$0xff] %vm825, %v754
        %829 = vst.msk [vmem:[%s297 + $0x18] sm:$0xff] %vm825, %v822
        %830 = vst.msk [vmem:[%s297 + $0x20] sm:$0xff] %vm825, %v755
        %831 = vst.msk [vmem:[%s297 + $0x28] sm:$0xff] %vm825, %v823
        %832 = vst.msk [vmem:[%s297 + $0x30] sm:$0xff] %vm825, %v756
        %833 = vst.msk [vmem:[%s297 + $0x38] sm:$0xff] %vm825, %v824
        %s834 = sand.u32 %s122, 1
        %s835 = scalar_lea.sflag [#allocation4], %s834
        %s836 = sand.u32 %s122, 1
        %s837 = smul.addr %s836, 32
        %s838 = scalar_lea.vmem [#allocation10], %s837
        %p839 = scmp.lt.s32.totalorder %s25, 1
        %s840 = scalar_select %p839, %s25, 1
        %s841 = smul.addr %s840, 8
        %s842 = smul.addr %s841, 8
        %s843 = scalar_lea.vmem %s5, %s842
        // Predicated region
        $region53: #{tpu_custom_call.1} parent=35 // pred_check
          %p844 = pneg %p132
        $region54: #{tpu_custom_call.1} parent=35 // pred_check_branch
          %846 = sbr.rel (%p844) target = $region56
        $region55: #{tpu_custom_call.1} parent=35 // pred_region
          %s848 = ssub.s32 512, 512
          %849 = vsyncadd %s835, %s848
          %s850 = smul.addr %s25, 4
          %s851 = smul.addr %s850, 128
          %s852 = scalar_lea.hbm %s4, %s851
          %s853 = sshll.u32 %s838, 4
          %s854 = int_to_ptr.vmem [resolvable:$true] %s853
          %859 = dma.vmem_to_hbm [thread:$0]  %s854, 512, %s852, %s835, 128, 128, 8
        $region56: #{tpu_custom_call.1} parent=35 // pred_fallthru
          _
        // Predicated region
        $region57: #{tpu_custom_call.1} parent=35 // pred_check
          %p860 = pneg %p158
        $region58: #{tpu_custom_call.1} parent=35 // pred_check_branch
          %862 = sbr.rel (%p860) target = $region60
        $region59: #{tpu_custom_call.1} parent=35 // pred_region
          _
        $region60: #{tpu_custom_call.1} parent=35 // pred_fallthru
          _
      $region36: #{tpu_custom_call.1} parent=5 // pred_fallthru
        _
      %p863 = scmp.le.s32.totalorder 2, %s20
      // Predicated region
      $region61: #{tpu_custom_call.1} parent=5 // pred_check
        %p864 = pneg %p863
      $region62: #{tpu_custom_call.1} parent=5 // pred_check_branch
        %866 = sbr.rel (%p864) target = $region64
      $region63: #{tpu_custom_call.1} parent=5 // pred_region
        %s867 = ssub.s32 %s20, 2
        // Predicated region
        $region65: #{tpu_custom_call.1} parent=63 // pred_check
          %p868 = pneg %p138
        $region66: #{tpu_custom_call.1} parent=63 // pred_check_branch
          %870 = sbr.rel (%p868) target = $region68
        $region67: #{tpu_custom_call.1} parent=63 // pred_region
          %s871 = sand.u32 %s123, 1
          %s872 = scalar_lea.sflag [#allocation4], %s871
          %s873 = sand.u32 %s123, 1
          %s874 = smul.addr %s873, 32
          %s875 = scalar_lea.vmem [#allocation10], %s874
          %876 = dma.done %s872, 512
        $region68: #{tpu_custom_call.1} parent=63 // pred_fallthru
          _
        // Predicated region
        $region69: #{tpu_custom_call.1} parent=63 // pred_check
          %p877 = pneg %p164
        $region70: #{tpu_custom_call.1} parent=63 // pred_check_branch
          %879 = sbr.rel (%p877) target = $region72
        $region71: #{tpu_custom_call.1} parent=63 // pred_region
          %p880 = scmp.lt.s32.totalorder %s26, 1
          %s881 = scalar_select %p880, %s26, 1
          %s882 = smul.addr %s881, 8
          %s883 = smul.addr %s882, 8
          %s884 = scalar_lea.vmem %s5, %s883
        $region72: #{tpu_custom_call.1} parent=63 // pred_fallthru
          _
      $region64: #{tpu_custom_call.1} parent=5 // pred_fallthru
        _
    $region6: #{tpu_custom_call.1} parent=1 // loop_footer
      %s24 = sadd.s32 1, %s20
    $region7: #{tpu_custom_call.1} parent=1 // loop_footer_branch
      %19 = sbr.rel target = $region3
    $region8: #{tpu_custom_call.1} parent=1 // loop_exit
      _
    %885 = vsyncpa [#allocation3], 1
    %s886 = scalar_lea.sflag [#allocation3], 1
    %887 = vsyncpa %s886, 1
    %888 = vsyncpa [#allocation6], 1
    %889 = vsyncpa [#allocation9], 1
    %890 = vsyncpa [#allocation4], 1
    %s891 = scalar_lea.sflag [#allocation4], 1
    %892 = vsyncpa %s891, 1

</llo_original>
